<compile_context>
chip_gen: v7x
topology: tpu7x:2x2x1
jax: 0.10.0
libtpu: 0.0.40
codegen_flags: <defaults>
</compile_context>

<pallas_src>
import functools

import jax
import jax.numpy as jnp
from jax.experimental import pallas as pl
from jax.experimental.pallas import tpu as pltpu

_LANE = 128


def _round_up(x, m):
    return ((x + m - 1) // m) * m


def _vmem_budget_bytes():
    """Per-generation VMEM budget with headroom for compiler scratch."""
    try:
        cap = int(pltpu.get_tpu_info().vmem_capacity_bytes)
    except Exception:
        cap = 64 << 20
    return max(int(cap * 0.85), 32 << 20)


# ----------------------------------------------------------------------------
# Kernels
# ----------------------------------------------------------------------------
def _mlp_kernel_resident(x_ref, w1_ref, b1_ref, w2_ref, b2_ref, o_ref):
    """Both weight matrices fully VMEM-resident; one row tile per grid step."""
    h = jnp.dot(x_ref[...], w1_ref[...], preferred_element_type=jnp.float32)
    h = jnp.maximum(h + b1_ref[...].astype(jnp.float32), 0.0)
    out = jnp.dot(h.astype(w2_ref.dtype), w2_ref[...],
                  preferred_element_type=jnp.float32)
    out = out + b2_ref[...].astype(jnp.float32)
    o_ref[...] = out.astype(o_ref.dtype)


def _mlp_kernel_hidden_tiled(x_ref, w1_ref, b1_ref, w2_ref, b2_ref, o_ref,
                             acc_ref):
    """Hidden dim tiled along grid axis 1 ("arbitrary"); weight tiles are
    double-buffered so their DMA overlaps the matmuls.  ReLU is exact per
    hidden tile (lin1 contraction over in_dim is complete within a tile)."""
    k = pl.program_id(1)

    @pl.when(k == 0)
    def _():
        acc_ref[...] = jnp.zeros_like(acc_ref)

    h = jnp.dot(x_ref[...], w1_ref[...], preferred_element_type=jnp.float32)
    h = jnp.maximum(h + b1_ref[...].astype(jnp.float32), 0.0)
    acc_ref[...] += jnp.dot(h.astype(w2_ref.dtype), w2_ref[...],
                            preferred_element_type=jnp.float32)

    @pl.when(k == pl.num_programs(1) - 1)
    def _():
        o_ref[...] = (acc_ref[...]
                      + b2_ref[...].astype(jnp.float32)).astype(o_ref.dtype)


# ----------------------------------------------------------------------------
# Tiling policy
# ----------------------------------------------------------------------------
def _choose_tiles(n, in_p, hid_p, out_p, x_itemsize, w_itemsize, budget,
                  force_tiled=False):
    """Returns (block_n, tile_h).  tile_h == hid_p -> fully-resident weights."""

    def act_bytes(bn, th):
        # double-buffered x/out row tiles + f32 hidden (+ cast) + f32 acc/out.
        return (2 * bn * (in_p + out_p) * x_itemsize
                + bn * th * (4 + w_itemsize)
                + bn * out_p * 4)

    n128 = _round_up(max(n, 1), _LANE)

    def pick_bn(weight_bytes, th):
        cands = [bn for bn in (1024, 512, 256, 128) if n128 % bn == 0]
        # Prefer >=2 row tiles so both v7x TensorCores get work; per-step
        # overhead (~0.35us) is negligible on v5e/v6e.
        multi = [bn for bn in cands if n128 // bn >= 2]
        ordered = multi + [bn for bn in cands if bn not in multi]
        for bn in ordered:
            if weight_bytes + act_bytes(bn, th) <= budget:
                return bn
        return 128

    resident_w = (in_p * hid_p + hid_p * out_p + hid_p + out_p) * w_itemsize
    if not force_tiled and resident_w + act_bytes(128, hid_p) <= budget:
        return pick_bn(resident_w, hid_p), hid_p

    # Hidden-dim tiling: W1 (in_p, th) and W2 (th, out_p) double-buffered.
    for th in (2048, 1024, 512, 256, 128):
        if hid_p % th != 0:
            continue
        w_bytes = (2 * (in_p * th + th * out_p + th) + out_p) * w_itemsize
        if w_bytes + act_bytes(128, th) <= budget:
            return pick_bn(w_bytes, th), th
    return 128, 128


# ----------------------------------------------------------------------------
# Wrapper
# ----------------------------------------------------------------------------
@functools.partial(jax.jit, static_argnames=("out_dim", "block_n", "tile_h"))
def mlp_forward(x, w1, b1, w2, b2, *, out_dim=None, block_n=None, tile_h=None):
    """Fused Linear->ReLU->Linear.

    x : (N, in_dim); w1: (in_dim, hidden); b1: (1, hidden);
    w2: (hidden, out_dim); b2: (1, out_dim).  Weights are stored transposed
    relative to torch.nn.Linear.  Returns (N, out_dim).  Works for f32 or
    bf16 inputs/weights; accumulation is always f32 (note: f32 x with bf16
    weights downcasts the hidden activation to bf16 for the second matmul).
    Pass pre-padded params from pad_mlp_params() plus `out_dim` to skip
    per-call weight padding.  `tile_h` forces the hidden-tiled path.
    """
    n, in_dim = x.shape
    hidden = w1.shape[1]
    out_dim_w = w2.shape[1]
    if out_dim is None:
        out_dim = out_dim_w

    # Pad feature dims to the 128-lane width so every tile (in particular the
    # output) is lane-dense; zero padding is exact (ReLU(0)=0, zero rows/cols
    # contribute nothing) and sliced off below.
    in_p = _round_up(in_dim, _LANE)
    hid_p = _round_up(hidden, _LANE)
    out_p = _round_up(out_dim_w, _LANE)

    x_itemsize = jnp.dtype(x.dtype).itemsize
    w_itemsize = jnp.dtype(w1.dtype).itemsize
    budget = _vmem_budget_bytes()

    auto_bn, auto_th = _choose_tiles(n, in_p, hid_p, out_p, x_itemsize,
                                     w_itemsize, budget,
                                     force_tiled=tile_h is not None)
    if block_n is None:
        block_n = auto_bn
    if tile_h is None:
        tile_h = auto_th
    assert hid_p % tile_h == 0, "tile_h must divide the padded hidden dim"
    n_p = _round_up(n, block_n)

    # Pad only when needed (static shape checks -> no-ops for pre-padded/
    # already-aligned operands).
    if x.shape != (n_p, in_p):
        x = jnp.pad(x, ((0, n_p - n), (0, in_p - in_dim)))
    if w1.shape != (in_p, hid_p):
        w1 = jnp.pad(w1, ((0, in_p - in_dim), (0, hid_p - hidden)))
    if b1.shape != (1, hid_p):
        b1 = jnp.pad(b1, ((0, 0), (0, hid_p - hidden)))
    if w2.shape != (hid_p, out_p):
        w2 = jnp.pad(w2, ((0, hid_p - hidden), (0, out_p - out_dim_w)))
    if b2.shape != (1, out_p):
        b2 = jnp.pad(b2, ((0, 0), (0, out_p - out_dim_w)))

    cost = pl.CostEstimate(
        flops=2 * n_p * (in_p * hid_p + hid_p * out_p),
        transcendentals=0,
        bytes_accessed=((n_p * in_p + n_p * out_p) * x_itemsize
                        + (in_p * hid_p + hid_p * out_p + hid_p + out_p)
                        * w_itemsize),
    )
    compiler_params = pltpu.CompilerParams(
        dimension_semantics=(("parallel",) if tile_h == hid_p
                             else ("parallel", "arbitrary")),
        vmem_limit_bytes=int(budget),
    )
    out_shape = jax.ShapeDtypeStruct((n_p, out_p), x.dtype)

    if tile_h == hid_p:
        # ---- Fully-resident weights, 1-D grid over row tiles -------------
        resident = pl.Buffered(1)  # constant block index -> single-buffer
        grid_spec = pltpu.PrefetchScalarGridSpec(
            num_scalar_prefetch=0,
            grid=(n_p // block_n,),
            in_specs=[
                pl.BlockSpec((block_n, in_p), lambda i: (i, 0)),        # x
                pl.BlockSpec((in_p, hid_p), lambda i: (0, 0),
                             pipeline_mode=resident),                   # W1
                pl.BlockSpec((1, hid_p), lambda i: (0, 0),
                             pipeline_mode=resident),                   # b1
                pl.BlockSpec((hid_p, out_p), lambda i: (0, 0),
                             pipeline_mode=resident),                   # W2
                pl.BlockSpec((1, out_p), lambda i: (0, 0),
                             pipeline_mode=resident),                   # b2
            ],
            out_specs=pl.BlockSpec((block_n, out_p), lambda i: (i, 0)),
        )
        kernel = _mlp_kernel_resident
    else:
        # ---- Hidden-dim tiled, 2-D grid (rows parallel, hidden arbitrary) -
        grid_spec = pltpu.PrefetchScalarGridSpec(
            num_scalar_prefetch=0,
            grid=(n_p // block_n, hid_p // tile_h),
            in_specs=[
                pl.BlockSpec((block_n, in_p), lambda i, k: (i, 0)),     # x
                pl.BlockSpec((in_p, tile_h), lambda i, k: (0, k)),      # W1
                pl.BlockSpec((1, tile_h), lambda i, k: (0, k)),         # b1
                pl.BlockSpec((tile_h, out_p), lambda i, k: (k, 0)),     # W2
                pl.BlockSpec((1, out_p), lambda i, k: (0, 0),
                             pipeline_mode=pl.Buffered(1)),             # b2
            ],
            out_specs=pl.BlockSpec((block_n, out_p), lambda i, k: (i, 0)),
            scratch_shapes=[pltpu.VMEM((block_n, out_p), jnp.float32)],
        )
        kernel = _mlp_kernel_hidden_tiled

    out_padded = pl.pallas_call(
        kernel,
        out_shape=out_shape,
        grid_spec=grid_spec,
        compiler_params=compiler_params,
        cost_estimate=cost,
    )(x, w1, b1, w2, b2)

    return out_padded[:n, :out_dim]


def pad_mlp_params(w1, b1, w2, b2):
    """Pre-pad weights/biases to 128-lane-aligned shapes once at init so
    mlp_forward skips per-call weight padding (otherwise a full extra HBM
    round-trip of both weight matrices on every call)."""
    in_dim, hidden = w1.shape
    out_dim = w2.shape[1]
    in_p, hid_p, out_p = (_round_up(d, _LANE) for d in (in_dim, hidden, out_dim))
    w1p = jnp.pad(w1, ((0, in_p - in_dim), (0, hid_p - hidden)))
    b1p = jnp.pad(b1, ((0, 0), (0, hid_p - hidden)))
    w2p = jnp.pad(w2, ((0, hid_p - hidden), (0, out_p - out_dim)))
    b2p = jnp.pad(b2, ((0, 0), (0, out_p - out_dim)))
    return w1p, b1p, w2p, b2p


def init_mlp_params(key, in_dim, hidden, out_dim, dtype=jnp.float32):
    """Deterministic init mirroring torch.nn.Linear defaults:
    W, b ~ U(-1/sqrt(fan_in), 1/sqrt(fan_in)). Weights stored transposed."""
    k1, k2, k3, k4 = jax.random.split(key, 4)
    bound1 = 1.0 / jnp.sqrt(in_dim)
    bound2 = 1.0 / jnp.sqrt(hidden)
    w1 = jax.random.uniform(k1, (in_dim, hidden), dtype, -bound1, bound1)
    b1 = jax.random.uniform(k2, (1, hidden), dtype, -bound1, bound1)
    w2 = jax.random.uniform(k3, (hidden, out_dim), dtype, -bound2, bound2)
    b2 = jax.random.uniform(k4, (1, out_dim), dtype, -bound2, bound2)
    return w1, b1, w2, b2


def _ref_mlp(x, w1, b1, w2, b2):
    x, w1, b1, w2, b2 = (a.astype(jnp.float32) for a in (x, w1, b1, w2, b2))
    return jnp.maximum(x @ w1 + b1, 0.0) @ w2 + b2


if __name__ == "__main__":
    key = jax.random.PRNGKey(0)
    kx, kp, kx2, kp2 = jax.random.split(key, 4)

    # --- 1) f32, resident-weight path (exact vs pure-JAX reference) ---------
    N, IN_DIM, HIDDEN, OUT_DIM = 16, 32, 64, 8
    x = jax.random.normal(kx, (N, IN_DIM), jnp.float32)
    w1, b1, w2, b2 = init_mlp_params(kp, IN_DIM, HIDDEN, OUT_DIM)
    out = jax.block_until_ready(mlp_forward(x, w1, b1, w2, b2))
    ref = _ref_mlp(x, w1, b1, w2, b2)
    assert out.shape == (N, OUT_DIM)
    assert jnp.allclose(out, ref, atol=1e-5, rtol=1e-5)

    # --- 2) f32, forced hidden-tiled path (accumulator + multi row tiles) ---
    N2, IN2, HID2, OUT2 = 200, 48, 256, 24
    x2 = jax.random.normal(kx2, (N2, IN2), jnp.float32)
    p2 = init_mlp_params(kp2, IN2, HID2, OUT2)
    out2 = jax.block_until_ready(mlp_forward(x2, *p2, tile_h=128))
    ref2 = _ref_mlp(x2, *p2)
    assert out2.shape == (N2, OUT2)
    assert jnp.allclose(out2, ref2, atol=1e-4, rtol=1e-4)

    # --- 3) bf16 with pre-padded (cached) weights, f32 accumulation ---------
    xb = x.astype(jnp.bfloat16)
    w1b, b1b, w2b, b2b = (a.astype(jnp.bfloat16) for a in (w1, b1, w2, b2))
    w1p, b1p, w2p, b2p = pad_mlp_params(w1b, b1b, w2b, b2b)
    out_bf16 = jax.block_until_ready(
        mlp_forward(xb, w1p, b1p, w2p, b2p, out_dim=OUT_DIM))
    ref_bf16 = _ref_mlp(xb, w1b, b1b, w2b, b2b)
    assert out_bf16.shape == (N, OUT_DIM)
    assert jnp.allclose(out_bf16.astype(jnp.float32), ref_bf16,
                        atol=0.1, rtol=0.1)

    print("KERNEL_OK")
</pallas_src>

<mosaic_0001>
module attributes {stable_mosaic.version = 11 : i64} {
  func.func @_mlp_kernel_resident(%arg0: i32, %arg1: memref<128x128xf32, #tpu.memory_space<vmem>>, %arg2: memref<128x128xf32, #tpu.memory_space<vmem>>, %arg3: memref<1x128xf32, #tpu.memory_space<vmem>>, %arg4: memref<128x128xf32, #tpu.memory_space<vmem>>, %arg5: memref<1x128xf32, #tpu.memory_space<vmem>>, %arg6: memref<128x128xf32, #tpu.memory_space<vmem>>) attributes {dimension_semantics = [#tpu.dimension_semantics<parallel>], iteration_bounds = array<i64: 1>, scalar_prefetch = 0 : i64, scratch_operands = 0 : i64, tpu.core_type = #tpu.core_type<tc>, window_params = [{transform_indices = @transform_0, window_bounds = array<i64: 128, 128>}, {pipeline_mode = #tpu.pipeline_mode<synchronous>, transform_indices = @transform_1, window_bounds = array<i64: 128, 128>}, {pipeline_mode = #tpu.pipeline_mode<synchronous>, transform_indices = @transform_2, window_bounds = array<i64: 1, 128>}, {pipeline_mode = #tpu.pipeline_mode<synchronous>, transform_indices = @transform_3, window_bounds = array<i64: 128, 128>}, {pipeline_mode = #tpu.pipeline_mode<synchronous>, transform_indices = @transform_4, window_bounds = array<i64: 1, 128>}, {transform_indices = @transform_5, window_bounds = array<i64: 128, 128>}]} {
    %c0 = arith.constant 0 : index
    %c0_0 = arith.constant 0 : index
    %0 = vector.load %arg1[%c0, %c0_0] : memref<128x128xf32, #tpu.memory_space<vmem>>, vector<128x128xf32>
    %c0_1 = arith.constant 0 : index
    %c0_2 = arith.constant 0 : index
    %1 = vector.load %arg2[%c0_1, %c0_2] : memref<128x128xf32, #tpu.memory_space<vmem>>, vector<128x128xf32>
    %cst = arith.constant dense<0.000000e+00> : vector<128x128xf32>
    %2 = tpu.matmul %0, %1, %cst {dimension_numbers = #tpu.dot_dimension_numbers<[1], [0], [0], [1], [0, 0, 1, 1], [], []>} : vector<128x128xf32>, vector<128x128xf32>, vector<128x128xf32> -> vector<128x128xf32>
    %c0_3 = arith.constant 0 : index
    %c0_4 = arith.constant 0 : index
    %3 = vector.load %arg3[%c0_3, %c0_4] : memref<1x128xf32, #tpu.memory_space<vmem>>, vector<1x128xf32>
    %4 = vector.broadcast %3 : vector<1x128xf32> to vector<128x128xf32>
    %5 = arith.addf %2, %4 : vector<128x128xf32>
    %cst_5 = arith.constant 0.000000e+00 : f32
    %6 = vector.broadcast %cst_5 : f32 to vector<128x128xf32>
    %7 = arith.maximumf %5, %6 : vector<128x128xf32>
    %c0_6 = arith.constant 0 : index
    %c0_7 = arith.constant 0 : index
    %8 = vector.load %arg4[%c0_6, %c0_7] : memref<128x128xf32, #tpu.memory_space<vmem>>, vector<128x128xf32>
    %cst_8 = arith.constant dense<0.000000e+00> : vector<128x128xf32>
    %9 = tpu.matmul %7, %8, %cst_8 {dimension_numbers = #tpu.dot_dimension_numbers<[1], [0], [0], [1], [0, 0, 1, 1], [], []>} : vector<128x128xf32>, vector<128x128xf32>, vector<128x128xf32> -> vector<128x128xf32>
    %c0_9 = arith.constant 0 : index
    %c0_10 = arith.constant 0 : index
    %10 = vector.load %arg5[%c0_9, %c0_10] : memref<1x128xf32, #tpu.memory_space<vmem>>, vector<1x128xf32>
    %11 = vector.broadcast %10 : vector<1x128xf32> to vector<128x128xf32>
    %12 = arith.addf %9, %11 : vector<128x128xf32>
    %c0_11 = arith.constant 0 : index
    %c0_12 = arith.constant 0 : index
    %13 = vector.load %arg6[%c0_11, %c0_12] : memref<128x128xf32, #tpu.memory_space<vmem>>, vector<128x128xf32>
    tpu.vector_store %arg6[%c0_11, %c0_12], %12 {strides = array<i32>} : memref<128x128xf32, #tpu.memory_space<vmem>>, vector<128x128xf32>,
    return
  }
  func.func @transform_0(%arg0: i32) -> (i32, i32) {
    %c0_i32 = arith.constant 0 : i32
    %c0_i32_0 = arith.constant 0 : i32
    return %arg0, %c0_i32 : i32, i32
  }
  func.func @transform_1(%arg0: i32) -> (i32, i32) {
    %c0_i32 = arith.constant 0 : i32
    %c0_i32_0 = arith.constant 0 : i32
    %c0_i32_1 = arith.constant 0 : i32
    return %c0_i32, %c0_i32_0 : i32, i32
  }
  func.func @transform_2(%arg0: i32) -> (i32, i32) {
    %c0_i32 = arith.constant 0 : i32
    %c0_i32_0 = arith.constant 0 : i32
    %c0_i32_1 = arith.constant 0 : i32
    return %c0_i32, %c0_i32_0 : i32, i32
  }
  func.func @transform_3(%arg0: i32) -> (i32, i32) {
    %c0_i32 = arith.constant 0 : i32
    %c0_i32_0 = arith.constant 0 : i32
    %c0_i32_1 = arith.constant 0 : i32
    return %c0_i32, %c0_i32_0 : i32, i32
  }
  func.func @transform_4(%arg0: i32) -> (i32, i32) {
    %c0_i32 = arith.constant 0 : i32
    %c0_i32_0 = arith.constant 0 : i32
    %c0_i32_1 = arith.constant 0 : i32
    return %c0_i32, %c0_i32_0 : i32, i32
  }
  func.func @transform_5(%arg0: i32) -> (i32, i32) {
    %c0_i32 = arith.constant 0 : i32
    %c0_i32_0 = arith.constant 0 : i32
    return %arg0, %c0_i32 : i32, i32
  }
}

</mosaic_0001>

<llo_original>
// kernel: mlp_forward.1
$region0: #{mlp_forward.1}
  #allocation0 [shape = 'u32[]', space=smem, size = 0x4, offset = 0x4, fixed_abs, tag = 'smem constant byte address 0x4 - core index']
  #allocation1 [shape = 'u32[144,128]{1,0:T(1,128)}', space=vmem, size = 0x12000, scoped, tag = 'internal scratch']
  %s0 = inlined_call_operand.vmem [shape: f32[128,128], index: 0, kind: input, shape index: {}]
  %s1 = inlined_call_operand.vmem [shape: f32[128,128], index: 1, kind: input, shape index: {}]
  %s2 = inlined_call_operand.vmem [shape: f32[1,128], index: 2, kind: input, shape index: {}]
  %s3 = inlined_call_operand.vmem [shape: f32[128,128], index: 3, kind: input, shape index: {}]
  %s4 = inlined_call_operand.vmem [shape: f32[1,128], index: 4, kind: input, shape index: {}]
  %s5 = inlined_call_operand.vmem [shape: f32[128,128], index: 5, kind: output, shape index: {}]
  %s6 = sld [smem:[#allocation0]]
  $region30: #{mlp_forward.1} parent=0
    _
  %s8 = ssub.s32 1, %s6
  %s9 = scalar_select 0, %s8, %s6
  // Predicated region
  $region2: #{mlp_forward.1} parent=0 // pred_check
    _
  $region3: #{mlp_forward.1} parent=0 // pred_check_branch
    %11 = sbr.rel (0) target = $region5
  $region4: #{mlp_forward.1} parent=0 // pred_region
    _
  $region5: #{mlp_forward.1} parent=0 // pred_fallthru
    _
  // Predicated region
  $region6: #{mlp_forward.1} parent=0 // pred_check
    _
  $region7: #{mlp_forward.1} parent=0 // pred_check_branch
    %13 = sbr.rel (0) target = $region9
  $region8: #{mlp_forward.1} parent=0 // pred_region
    _
  $region9: #{mlp_forward.1} parent=0 // pred_fallthru
    _
  // Predicated region
  $region10: #{mlp_forward.1} parent=0 // pred_check
    _
  $region11: #{mlp_forward.1} parent=0 // pred_check_branch
    %15 = sbr.rel (0) target = $region13
  $region12: #{mlp_forward.1} parent=0 // pred_region
    _
  $region13: #{mlp_forward.1} parent=0 // pred_fallthru
    _
  // Predicated region
  $region14: #{mlp_forward.1} parent=0 // pred_check
    _
  $region15: #{mlp_forward.1} parent=0 // pred_check_branch
    %17 = sbr.rel (0) target = $region17
  $region16: #{mlp_forward.1} parent=0 // pred_region
    _
  $region17: #{mlp_forward.1} parent=0 // pred_fallthru
    _
  // Predicated region
  $region18: #{mlp_forward.1} parent=0 // pred_check
    _
  $region19: #{mlp_forward.1} parent=0 // pred_check_branch
    %19 = sbr.rel (0) target = $region21
  $region20: #{mlp_forward.1} parent=0 // pred_region
    _
  $region21: #{mlp_forward.1} parent=0 // pred_fallthru
    _
  %v20 = vld [vmem:[%s0] sm:$0xff]
  %v21 = vld [vmem:[%s0 + $0x8] sm:$0xff]
  %v22 = vld [vmem:[%s0 + $0x10] sm:$0xff]
  %v23 = vld [vmem:[%s0 + $0x18] sm:$0xff]
  %v24 = vld [vmem:[%s0 + $0x20] sm:$0xff]
  %v25 = vld [vmem:[%s0 + $0x28] sm:$0xff]
  %v26 = vld [vmem:[%s0 + $0x30] sm:$0xff]
  %v27 = vld [vmem:[%s0 + $0x38] sm:$0xff]
  %v28 = vld [vmem:[%s0 + $0x40] sm:$0xff]
  %v29 = vld [vmem:[%s0 + $0x48] sm:$0xff]
  %v30 = vld [vmem:[%s0 + $0x50] sm:$0xff]
  %v31 = vld [vmem:[%s0 + $0x58] sm:$0xff]
  %v32 = vld [vmem:[%s0 + $0x60] sm:$0xff]
  %v33 = vld [vmem:[%s0 + $0x68] sm:$0xff]
  %v34 = vld [vmem:[%s0 + $0x70] sm:$0xff]
  %v35 = vld [vmem:[%s0 + $0x78] sm:$0xff]
  %v36 = vld [vmem:[%s1] sm:$0xff]
  %v37 = vld [vmem:[%s1 + $0x8] sm:$0xff]
  %v38 = vld [vmem:[%s1 + $0x10] sm:$0xff]
  %v39 = vld [vmem:[%s1 + $0x18] sm:$0xff]
  %v40 = vld [vmem:[%s1 + $0x20] sm:$0xff]
  %v41 = vld [vmem:[%s1 + $0x28] sm:$0xff]
  %v42 = vld [vmem:[%s1 + $0x30] sm:$0xff]
  %v43 = vld [vmem:[%s1 + $0x38] sm:$0xff]
  %v44 = vld [vmem:[%s1 + $0x40] sm:$0xff]
  %v45 = vld [vmem:[%s1 + $0x48] sm:$0xff]
  %v46 = vld [vmem:[%s1 + $0x50] sm:$0xff]
  %v47 = vld [vmem:[%s1 + $0x58] sm:$0xff]
  %v48 = vld [vmem:[%s1 + $0x60] sm:$0xff]
  %v49 = vld [vmem:[%s1 + $0x68] sm:$0xff]
  %v50 = vld [vmem:[%s1 + $0x70] sm:$0xff]
  %v51 = vld [vmem:[%s1 + $0x78] sm:$0xff]
  %v52 = vld [vmem:[%s2] sm:$0x1]
  %v54 = vlaneseq
  %v55 = vshrl.u32 %v54, 7
  %v56 = vsub.s32 0, %v55
  %v57 = vrot.slane %v52, %v56
  %59 = vmatprep.subr.mxu0 0.0
  %60 = vmatpush1.msra.mxu0 %v36
  %61 = vmatprep.subr.mxu0 0.0
  %62 = vmatpush1.msra.mxu0 %v37
  %63 = vmatprep.subr.mxu0 0.0
  %64 = vmatpush1.msra.mxu0 %v38
  %65 = vmatprep.subr.mxu0 0.0
  %66 = vmatpush1.msra.mxu0 %v39
  %67 = vmatprep.subr.mxu0 0.0
  %68 = vmatpush1.msra.mxu0 %v40
  %69 = vmatprep.subr.mxu0 0.0
  %70 = vmatpush1.msra.mxu0 %v41
  %71 = vmatprep.subr.mxu0 0.0
  %72 = vmatpush1.msra.mxu0 %v42
  %73 = vmatprep.subr.mxu0 0.0
  %74 = vmatpush1.msra.mxu0 %v43
  %75 = vmatprep.subr.mxu0 0.0
  %76 = vmatpush1.msra.mxu0 %v44
  %77 = vmatprep.subr.mxu0 0.0
  %78 = vmatpush1.msra.mxu0 %v45
  %79 = vmatprep.subr.mxu0 0.0
  %80 = vmatpush1.msra.mxu0 %v46
  %81 = vmatprep.subr.mxu0 0.0
  %82 = vmatpush1.msra.mxu0 %v47
  %83 = vmatprep.subr.mxu0 0.0
  %84 = vmatpush1.msra.mxu0 %v48
  %85 = vmatprep.subr.mxu0 0.0
  %86 = vmatpush1.msra.mxu0 %v49
  %87 = vmatprep.subr.mxu0 0.0
  %88 = vmatpush1.msra.mxu0 %v50
  %89 = vmatprep.subr.mxu0 0.0
  %90 = vmatpush1.msra.mxu0 %v51
  %91 = vmatprep.subr.mxu0 0.0
  %92 = vmatpush1.msra.mxu0 0.0
  %93 = vmatprep.subr.mxu0 0.0
  %94 = vmatpush1.msra.mxu0 0.0
  %95 = vmatprep.subr.mxu0 0.0
  %96 = vmatpush1.msra.mxu0 0.0
  %97 = vmatprep.subr.mxu0 0.0
  %98 = vmatpush1.msra.mxu0 0.0
  %99 = vmatprep.subr.mxu0 0.0
  %100 = vmatpush1.msra.mxu0 0.0
  %101 = vmatprep.subr.mxu0 0.0
  %102 = vmatpush1.msra.mxu0 0.0
  %103 = vmatprep.subr.mxu0 0.0
  %104 = vmatpush1.msra.mxu0 0.0
  %105 = vmatprep.subr.mxu0 0.0
  %106 = vmatpush1.msra.mxu0 0.0
  %107 = vmatprep.subr.mxu0 0.0
  %108 = vmatpush1.msra.mxu0 0.0
  %109 = vmatprep.subr.mxu0 0.0
  %110 = vmatpush1.msra.mxu0 0.0
  %111 = vmatprep.subr.mxu0 0.0
  %112 = vmatpush1.msra.mxu0 0.0
  %113 = vmatprep.subr.mxu0 0.0
  %114 = vmatpush1.msra.mxu0 0.0
  %115 = vmatprep.subr.mxu0 0.0
  %116 = vmatpush1.msra.mxu0 0.0
  %117 = vmatprep.subr.mxu0 0.0
  %118 = vmatpush1.msra.mxu0 0.0
  %119 = vmatprep.subr.mxu0 0.0
  %120 = vmatpush1.msra.mxu0 0.0
  %121 = vmatprep.subr.mxu0 0.0
  %122 = vmatpush1.msra.mxu0 0.0
  %123 = vmatprep.mubr.f32.mxu0 0.0
  %124 = vmatmul.mubr.f32.gmra.mrb[0].mxu0 %v20
  %v125 = vpop.f32.mrb[0].mxu0
  %v126 = vadd.f32 %v57, %v125
  %v127 = vpop.f32.mrb[0].mxu0
  %128 = vmatprep.mubr.f32.mxu0 0.0
  %129 = vmatmul.mubr.f32.gmra.mrb[0].mxu0 %v21
  %v130 = vpop.f32.mrb[0].mxu0
  %v131 = vadd.f32 %v57, %v130
  %v132 = vpop.f32.mrb[0].mxu0
  %133 = vmatprep.mubr.f32.mxu0 0.0
  %134 = vmatmul.mubr.f32.gmra.mrb[0].mxu0 %v22
  %v135 = vpop.f32.mrb[0].mxu0
  %v136 = vadd.f32 %v57, %v135
  %v137 = vpop.f32.mrb[0].mxu0
  %138 = vmatprep.mubr.f32.mxu0 0.0
  %139 = vmatmul.mubr.f32.gmra.mrb[0].mxu0 %v23
  %v140 = vpop.f32.mrb[0].mxu0
  %v141 = vadd.f32 %v57, %v140
  %v142 = vpop.f32.mrb[0].mxu0
  %143 = vmatprep.mubr.f32.mxu0 0.0
  %144 = vmatmul.mubr.f32.gmra.mrb[0].mxu0 %v24
  %v145 = vpop.f32.mrb[0].mxu0
  %v146 = vadd.f32 %v57, %v145
  %v147 = vpop.f32.mrb[0].mxu0
  %148 = vmatprep.mubr.f32.mxu0 0.0
  %149 = vmatmul.mubr.f32.gmra.mrb[0].mxu0 %v25
  %v150 = vpop.f32.mrb[0].mxu0
  %v151 = vadd.f32 %v57, %v150
  %v152 = vpop.f32.mrb[0].mxu0
  %153 = vmatprep.mubr.f32.mxu0 0.0
  %154 = vmatmul.mubr.f32.gmra.mrb[0].mxu0 %v26
  %v155 = vpop.f32.mrb[0].mxu0
  %v156 = vadd.f32 %v57, %v155
  %v157 = vpop.f32.mrb[0].mxu0
  %158 = vmatprep.mubr.f32.mxu0 0.0
  %159 = vmatmul.mubr.f32.gmra.mrb[0].mxu0 %v27
  %v160 = vpop.f32.mrb[0].mxu0
  %v161 = vadd.f32 %v57, %v160
  %v162 = vpop.f32.mrb[0].mxu0
  %163 = vmatprep.mubr.f32.mxu0 0.0
  %164 = vmatmul.mubr.f32.gmra.mrb[0].mxu0 %v28
  %v165 = vpop.f32.mrb[0].mxu0
  %v166 = vadd.f32 %v57, %v165
  %v167 = vpop.f32.mrb[0].mxu0
  %168 = vmatprep.mubr.f32.mxu0 0.0
  %169 = vmatmul.mubr.f32.gmra.mrb[0].mxu0 %v29
  %v170 = vpop.f32.mrb[0].mxu0
  %v171 = vadd.f32 %v57, %v170
  %v172 = vpop.f32.mrb[0].mxu0
  %173 = vmatprep.mubr.f32.mxu0 0.0
  %174 = vmatmul.mubr.f32.gmra.mrb[0].mxu0 %v30
  %v175 = vpop.f32.mrb[0].mxu0
  %v176 = vadd.f32 %v57, %v175
  %v177 = vpop.f32.mrb[0].mxu0
  %178 = vmatprep.mubr.f32.mxu0 0.0
  %179 = vmatmul.mubr.f32.gmra.mrb[0].mxu0 %v31
  %v180 = vpop.f32.mrb[0].mxu0
  %v181 = vadd.f32 %v57, %v180
  %v182 = vpop.f32.mrb[0].mxu0
  %183 = vmatprep.mubr.f32.mxu0 0.0
  %184 = vmatmul.mubr.f32.gmra.mrb[0].mxu0 %v32
  %v185 = vpop.f32.mrb[0].mxu0
  %v186 = vadd.f32 %v57, %v185
  %v187 = vpop.f32.mrb[0].mxu0
  %188 = vmatprep.mubr.f32.mxu0 0.0
  %189 = vmatmul.mubr.f32.gmra.mrb[0].mxu0 %v33
  %v190 = vpop.f32.mrb[0].mxu0
  %v191 = vadd.f32 %v57, %v190
  %v192 = vpop.f32.mrb[0].mxu0
  %193 = vmatprep.mubr.f32.mxu0 0.0
  %194 = vmatmul.mubr.f32.gmra.mrb[0].mxu0 %v34
  %v195 = vpop.f32.mrb[0].mxu0
  %v196 = vadd.f32 %v57, %v195
  %v197 = vpop.f32.mrb[0].mxu0
  %198 = vmatprep.mubr.f32.mxu0 0.0
  %199 = vmatmul.mubr.f32.gmra.mrb[0].mxu0 %v35
  %v200 = vpop.f32.mrb[0].mxu0
  %v201 = vadd.f32 %v57, %v200
  %v202 = vpop.f32.mrb[0].mxu0
  %203 = vdwg.mxu0
  %v204 = vmax.f32 %v126, 0.0
  %v205 = vmax.f32 %v131, 0.0
  %v206 = vmax.f32 %v136, 0.0
  %v207 = vmax.f32 %v141, 0.0
  %v208 = vmax.f32 %v146, 0.0
  %v209 = vmax.f32 %v151, 0.0
  %v210 = vmax.f32 %v156, 0.0
  %v211 = vmax.f32 %v161, 0.0
  %v212 = vmax.f32 %v166, 0.0
  %v213 = vmax.f32 %v171, 0.0
  %v214 = vmax.f32 %v176, 0.0
  %v215 = vmax.f32 %v181, 0.0
  %v216 = vmax.f32 %v186, 0.0
  %v217 = vmax.f32 %v191, 0.0
  %v218 = vmax.f32 %v196, 0.0
  %v219 = vmax.f32 %v201, 0.0
  %v220 = vld [vmem:[%s3] sm:$0xff]
  %v221 = vld [vmem:[%s3 + $0x8] sm:$0xff]
  %v222 = vld [vmem:[%s3 + $0x10] sm:$0xff]
  %v223 = vld [vmem:[%s3 + $0x18] sm:$0xff]
  %v224 = vld [vmem:[%s3 + $0x20] sm:$0xff]
  %v225 = vld [vmem:[%s3 + $0x28] sm:$0xff]
  %v226 = vld [vmem:[%s3 + $0x30] sm:$0xff]
  %v227 = vld [vmem:[%s3 + $0x38] sm:$0xff]
  %v228 = vld [vmem:[%s3 + $0x40] sm:$0xff]
  %v229 = vld [vmem:[%s3 + $0x48] sm:$0xff]
  %v230 = vld [vmem:[%s3 + $0x50] sm:$0xff]
  %v231 = vld [vmem:[%s3 + $0x58] sm:$0xff]
  %v232 = vld [vmem:[%s3 + $0x60] sm:$0xff]
  %v233 = vld [vmem:[%s3 + $0x68] sm:$0xff]
  %v234 = vld [vmem:[%s3 + $0x70] sm:$0xff]
  %v235 = vld [vmem:[%s3 + $0x78] sm:$0xff]
  %v236 = vld [vmem:[%s4] sm:$0x1]
  %v238 = vlaneseq
  %v239 = vshrl.u32 %v238, 7
  %v240 = vsub.s32 0, %v239
  %v241 = vrot.slane %v236, %v240
  %243 = vmatprep.subr.mxu0 0.0
  %244 = vmatpush1.msra.mxu0 %v220
  %245 = vmatprep.subr.mxu0 0.0
  %246 = vmatpush1.msra.mxu0 %v221
  %247 = vmatprep.subr.mxu0 0.0
  %248 = vmatpush1.msra.mxu0 %v222
  %249 = vmatprep.subr.mxu0 0.0
  %250 = vmatpush1.msra.mxu0 %v223
  %251 = vmatprep.subr.mxu0 0.0
  %252 = vmatpush1.msra.mxu0 %v224
  %253 = vmatprep.subr.mxu0 0.0
  %254 = vmatpush1.msra.mxu0 %v225
  %255 = vmatprep.subr.mxu0 0.0
  %256 = vmatpush1.msra.mxu0 %v226
  %257 = vmatprep.subr.mxu0 0.0
  %258 = vmatpush1.msra.mxu0 %v227
  %259 = vmatprep.subr.mxu0 0.0
  %260 = vmatpush1.msra.mxu0 %v228
  %261 = vmatprep.subr.mxu0 0.0
  %262 = vmatpush1.msra.mxu0 %v229
  %263 = vmatprep.subr.mxu0 0.0
  %264 = vmatpush1.msra.mxu0 %v230
  %265 = vmatprep.subr.mxu0 0.0
  %266 = vmatpush1.msra.mxu0 %v231
  %267 = vmatprep.subr.mxu0 0.0
  %268 = vmatpush1.msra.mxu0 %v232
  %269 = vmatprep.subr.mxu0 0.0
  %270 = vmatpush1.msra.mxu0 %v233
  %271 = vmatprep.subr.mxu0 0.0
  %272 = vmatpush1.msra.mxu0 %v234
  %273 = vmatprep.subr.mxu0 0.0
  %274 = vmatpush1.msra.mxu0 %v235
  %275 = vmatprep.subr.mxu0 0.0
  %276 = vmatpush1.msra.mxu0 0.0
  %277 = vmatprep.subr.mxu0 0.0
  %278 = vmatpush1.msra.mxu0 0.0
  %279 = vmatprep.subr.mxu0 0.0
  %280 = vmatpush1.msra.mxu0 0.0
  %281 = vmatprep.subr.mxu0 0.0
  %282 = vmatpush1.msra.mxu0 0.0
  %283 = vmatprep.subr.mxu0 0.0
  %284 = vmatpush1.msra.mxu0 0.0
  %285 = vmatprep.subr.mxu0 0.0
  %286 = vmatpush1.msra.mxu0 0.0
  %287 = vmatprep.subr.mxu0 0.0
  %288 = vmatpush1.msra.mxu0 0.0
  %289 = vmatprep.subr.mxu0 0.0
  %290 = vmatpush1.msra.mxu0 0.0
  %291 = vmatprep.subr.mxu0 0.0
  %292 = vmatpush1.msra.mxu0 0.0
  %293 = vmatprep.subr.mxu0 0.0
  %294 = vmatpush1.msra.mxu0 0.0
  %295 = vmatprep.subr.mxu0 0.0
  %296 = vmatpush1.msra.mxu0 0.0
  %297 = vmatprep.subr.mxu0 0.0
  %298 = vmatpush1.msra.mxu0 0.0
  %299 = vmatprep.subr.mxu0 0.0
  %300 = vmatpush1.msra.mxu0 0.0
  %301 = vmatprep.subr.mxu0 0.0
  %302 = vmatpush1.msra.mxu0 0.0
  %303 = vmatprep.subr.mxu0 0.0
  %304 = vmatpush1.msra.mxu0 0.0
  %305 = vmatprep.subr.mxu0 0.0
  %306 = vmatpush1.msra.mxu0 0.0
  %307 = vmatprep.mubr.f32.mxu0 0.0
  %308 = vmatmul.mubr.f32.gmra.mrb[0].mxu0 %v204
  %v309 = vpop.f32.mrb[0].mxu0
  %v310 = vadd.f32 %v241, %v309
  %v311 = vpop.f32.mrb[0].mxu0
  %312 = vmatprep.mubr.f32.mxu0 0.0
  %313 = vmatmul.mubr.f32.gmra.mrb[0].mxu0 %v205
  %v314 = vpop.f32.mrb[0].mxu0
  %v315 = vadd.f32 %v241, %v314
  %v316 = vpop.f32.mrb[0].mxu0
  %317 = vmatprep.mubr.f32.mxu0 0.0
  %318 = vmatmul.mubr.f32.gmra.mrb[0].mxu0 %v206
  %v319 = vpop.f32.mrb[0].mxu0
  %v320 = vadd.f32 %v241, %v319
  %v321 = vpop.f32.mrb[0].mxu0
  %322 = vmatprep.mubr.f32.mxu0 0.0
  %323 = vmatmul.mubr.f32.gmra.mrb[0].mxu0 %v207
  %v324 = vpop.f32.mrb[0].mxu0
  %v325 = vadd.f32 %v241, %v324
  %v326 = vpop.f32.mrb[0].mxu0
  %327 = vmatprep.mubr.f32.mxu0 0.0
  %328 = vmatmul.mubr.f32.gmra.mrb[0].mxu0 %v208
  %v329 = vpop.f32.mrb[0].mxu0
  %v330 = vadd.f32 %v241, %v329
  %v331 = vpop.f32.mrb[0].mxu0
  %332 = vmatprep.mubr.f32.mxu0 0.0
  %333 = vmatmul.mubr.f32.gmra.mrb[0].mxu0 %v209
  %v334 = vpop.f32.mrb[0].mxu0
  %v335 = vadd.f32 %v241, %v334
  %v336 = vpop.f32.mrb[0].mxu0
  %337 = vmatprep.mubr.f32.mxu0 0.0
  %338 = vmatmul.mubr.f32.gmra.mrb[0].mxu0 %v210
  %v339 = vpop.f32.mrb[0].mxu0
  %v340 = vadd.f32 %v241, %v339
  %v341 = vpop.f32.mrb[0].mxu0
  %342 = vmatprep.mubr.f32.mxu0 0.0
  %343 = vmatmul.mubr.f32.gmra.mrb[0].mxu0 %v211
  %v344 = vpop.f32.mrb[0].mxu0
  %v345 = vadd.f32 %v241, %v344
  %v346 = vpop.f32.mrb[0].mxu0
  %347 = vmatprep.mubr.f32.mxu0 0.0
  %348 = vmatmul.mubr.f32.gmra.mrb[0].mxu0 %v212
  %v349 = vpop.f32.mrb[0].mxu0
  %v350 = vadd.f32 %v241, %v349
  %v351 = vpop.f32.mrb[0].mxu0
  %352 = vmatprep.mubr.f32.mxu0 0.0
  %353 = vmatmul.mubr.f32.gmra.mrb[0].mxu0 %v213
  %v354 = vpop.f32.mrb[0].mxu0
  %v355 = vadd.f32 %v241, %v354
  %v356 = vpop.f32.mrb[0].mxu0
  %357 = vmatprep.mubr.f32.mxu0 0.0
  %358 = vmatmul.mubr.f32.gmra.mrb[0].mxu0 %v214
  %v359 = vpop.f32.mrb[0].mxu0
  %v360 = vadd.f32 %v241, %v359
  %v361 = vpop.f32.mrb[0].mxu0
  %362 = vmatprep.mubr.f32.mxu0 0.0
  %363 = vmatmul.mubr.f32.gmra.mrb[0].mxu0 %v215
  %v364 = vpop.f32.mrb[0].mxu0
  %v365 = vadd.f32 %v241, %v364
  %v366 = vpop.f32.mrb[0].mxu0
  %367 = vmatprep.mubr.f32.mxu0 0.0
  %368 = vmatmul.mubr.f32.gmra.mrb[0].mxu0 %v216
  %v369 = vpop.f32.mrb[0].mxu0
  %v370 = vadd.f32 %v241, %v369
  %v371 = vpop.f32.mrb[0].mxu0
  %372 = vmatprep.mubr.f32.mxu0 0.0
  %373 = vmatmul.mubr.f32.gmra.mrb[0].mxu0 %v217
  %v374 = vpop.f32.mrb[0].mxu0
  %v375 = vadd.f32 %v241, %v374
  %v376 = vpop.f32.mrb[0].mxu0
  %377 = vmatprep.mubr.f32.mxu0 0.0
  %378 = vmatmul.mubr.f32.gmra.mrb[0].mxu0 %v218
  %v379 = vpop.f32.mrb[0].mxu0
  %v380 = vadd.f32 %v241, %v379
  %v381 = vpop.f32.mrb[0].mxu0
  %382 = vmatprep.mubr.f32.mxu0 0.0
  %383 = vmatmul.mubr.f32.gmra.mrb[0].mxu0 %v219
  %v384 = vpop.f32.mrb[0].mxu0
  %v385 = vadd.f32 %v241, %v384
  %v386 = vpop.f32.mrb[0].mxu0
  %387 = vdwg.mxu0
  %388 = vst [vmem:[%s5] sm:$0xff] %v310
  %389 = vst [vmem:[%s5 + $0x8] sm:$0xff] %v315
  %390 = vst [vmem:[%s5 + $0x10] sm:$0xff] %v320
  %391 = vst [vmem:[%s5 + $0x18] sm:$0xff] %v325
  %392 = vst [vmem:[%s5 + $0x20] sm:$0xff] %v330
  %393 = vst [vmem:[%s5 + $0x28] sm:$0xff] %v335
  %394 = vst [vmem:[%s5 + $0x30] sm:$0xff] %v340
  %395 = vst [vmem:[%s5 + $0x38] sm:$0xff] %v345
  %396 = vst [vmem:[%s5 + $0x40] sm:$0xff] %v350
  %397 = vst [vmem:[%s5 + $0x48] sm:$0xff] %v355
  %398 = vst [vmem:[%s5 + $0x50] sm:$0xff] %v360
  %399 = vst [vmem:[%s5 + $0x58] sm:$0xff] %v365
  %400 = vst [vmem:[%s5 + $0x60] sm:$0xff] %v370
  %401 = vst [vmem:[%s5 + $0x68] sm:$0xff] %v375
  %402 = vst [vmem:[%s5 + $0x70] sm:$0xff] %v380
  %403 = vst [vmem:[%s5 + $0x78] sm:$0xff] %v385
  // Predicated region
  $region22: #{mlp_forward.1} parent=0 // pred_check
    _
  $region23: #{mlp_forward.1} parent=0 // pred_check_branch
    %405 = sbr.rel (0) target = $region25
  $region24: #{mlp_forward.1} parent=0 // pred_region
    _
  $region25: #{mlp_forward.1} parent=0 // pred_fallthru
    _
  // Predicated region
  $region26: #{mlp_forward.1} parent=0 // pred_check
    _
  $region27: #{mlp_forward.1} parent=0 // pred_check_branch
    %407 = sbr.rel (0) target = $region29
  $region28: #{mlp_forward.1} parent=0 // pred_region
    _
  $region29: #{mlp_forward.1} parent=0 // pred_fallthru
    _

</llo_original>
